<compile_context>
chip_gen: v6e
topology: v6e:2x2x1
jax: 0.10.0
libtpu: 0.0.40
codegen_flags: <defaults>
</compile_context>

<pallas_src>
import math

import jax
import jax.numpy as jnp
from jax import lax
from jax.experimental import pallas as pl
from jax.experimental.pallas import tpu as pltpu


_C_PAD = 128  # lane-dense channel padding for all layer outputs


def _round_up(x, m):
    return (x + m - 1) // m * m


def _vmem_limit_bytes():
    # Generation-aware VMEM request: leave ~25% headroom for compiler scratch.
    # v7x has 64 MiB/TC -> ~48 MiB; v5e/v6e have 128 MiB -> capped at 96 MiB.
    try:
        cap = int(pltpu.get_tpu_info().vmem_capacity_bytes)
    except Exception:
        cap = 64 * 1024 * 1024  # assume the tightest (v7x) budget
    return min(cap * 3 // 4, 96 * 1024 * 1024)


# ---------------------------------------------------------------------------
# Kernel: one GCN layer over a raw int8 adjacency.
#   acc_i = sum_k A_i8[i, k] @ XW_scaled[k]          (bf16 MXU, f32 accumulate)
#   H_i   = relu(dinv_i * acc_i + b)
#   out_i = dinv_i * (H_i @ W_next)    (fused, layer 1)   or   H_i   (layer 2)
# grid = (n_pad // tm, n_pad // tk); k is the reduction over A columns.
# ---------------------------------------------------------------------------
def _make_layer_kernel(fuse_next):
    def kernel(a_ref, dinv_ref, xw_ref, b_ref, *rest):
        if fuse_next:
            wn_ref, o_ref, acc_ref = rest
        else:
            o_ref, acc_ref = rest

        k = pl.program_id(1)

        @pl.when(k == 0)
        def _():
            acc_ref[...] = jnp.zeros_like(acc_ref)

        # Hot loop: int8 tile -> bf16 (two-step convert, both natively
        # supported), then a single MXU matmul against the VMEM-resident,
        # already column-scaled XW slice.
        tk = a_ref.shape[1]
        start = pl.multiple_of(k * tk, tk)
        xw = xw_ref[pl.ds(start, tk), :]
        a_bf16 = a_ref[...].astype(jnp.float32).astype(jnp.bfloat16)
        acc_ref[...] += jnp.dot(a_bf16, xw, preferred_element_type=jnp.float32)

        @pl.when(k == pl.num_programs(1) - 1)
        def _():
            # row-wise D^-1/2 scale + bias + ReLU, all in f32
            h = jnp.maximum(dinv_ref[...] * acc_ref[...] + b_ref[...], 0.0)
            if fuse_next:
                # Emit dinv * (H @ W_next): the next layer's (already
                # column-scaled) resident operand.  H itself never hits HBM.
                hw = jnp.dot(h, wn_ref[...], preferred_element_type=jnp.float32)
                o_ref[...] = (dinv_ref[...] * hw).astype(o_ref.dtype)
            else:
                o_ref[...] = h.astype(o_ref.dtype)

    return kernel


def gcn_layer(a_i8, dinv_rows, xw_scaled, b, w_next=None, *, tm, tk,
              out_dtype=jnp.bfloat16):
    n_pad = a_i8.shape[0]
    c_pad = xw_scaled.shape[1]
    grid = (n_pad // tm, n_pad // tk)
    fuse_next = w_next is not None

    flops = 2 * n_pad * n_pad * c_pad
    if fuse_next:
        flops += 2 * n_pad * c_pad * c_pad
    bytes_accessed = (a_i8.size * a_i8.dtype.itemsize          # int8 A stream
                      + xw_scaled.size * 2                      # resident XW
                      + n_pad * c_pad * 2                       # output
                      + n_pad * 4)                              # dinv

    in_specs = [
        pl.BlockSpec((tm, tk), lambda i, k: (i, k)),            # int8 A tile
        pl.BlockSpec((tm, 1), lambda i, k: (i, 0)),             # dinv rows
        pl.BlockSpec((n_pad, c_pad), lambda i, k: (0, 0)),      # resident XW
        pl.BlockSpec((1, c_pad), lambda i, k: (0, 0)),          # bias
    ]
    args = [a_i8, dinv_rows, xw_scaled, b]
    if fuse_next:
        in_specs.append(pl.BlockSpec((c_pad, c_pad), lambda i, k: (0, 0)))
        args.append(w_next)

    return pl.pallas_call(
        _make_layer_kernel(fuse_next),
        out_shape=jax.ShapeDtypeStruct((n_pad, c_pad), out_dtype),
        grid_spec=pltpu.PrefetchScalarGridSpec(
            num_scalar_prefetch=0,
            grid=grid,
            in_specs=in_specs,
            out_specs=pl.BlockSpec((tm, c_pad), lambda i, k: (i, 0)),
            scratch_shapes=[pltpu.VMEM((tm, c_pad), jnp.float32)],
        ),
        compiler_params=pltpu.CompilerParams(
            # row axis parallel (2x on v7x megacore when grid[0] is even),
            # k is the reduction -> arbitrary.
            dimension_semantics=("parallel", "arbitrary"),
            vmem_limit_bytes=_vmem_limit_bytes(),
        ),
        cost_estimate=pl.CostEstimate(flops=int(flops), transcendentals=0,
                                      bytes_accessed=int(bytes_accessed)),
    )(*args)


# ---------------------------------------------------------------------------
# Kernel: fused segment-mean pool + linear + sigmoid
#   pooled[g] = mean_{n: batch[n]==g} H2[n]   ;   out = sigmoid(pooled @ Wl + bl)
# grid = (n_pad // tp,)  (reduction over row tiles into a (g_pad, C) scratch)
# ---------------------------------------------------------------------------
def pool_head_kernel(h_ref, bid_ref, invc_ref, wlt_ref, bl_ref, o_ref,
                     pooled_ref):
    i = pl.program_id(0)

    @pl.when(i == 0)
    def _():
        pooled_ref[...] = jnp.zeros_like(pooled_ref)

    tp = h_ref.shape[0]
    g_pad = pooled_ref.shape[0]
    # Transposed segment one-hot (g_pad, tp), built directly in that layout so
    # the segment-sum matmul contracts dim1 x dim0 (no XLU transpose).
    onehot_t = (bid_ref[...] ==
                lax.broadcasted_iota(jnp.int32, (g_pad, tp), 0)
                ).astype(jnp.float32)
    weights_t = onehot_t * invc_ref[...]                # (g_pad, tp) * (g_pad, 1)
    pooled_ref[...] += jnp.dot(weights_t, h_ref[...].astype(jnp.float32),
                               preferred_element_type=jnp.float32)

    @pl.when(i == pl.num_programs(0) - 1)
    def _():
        # lane-dense (1, g_pad) logits = Wl^T · pooled^T + bl
        logits = lax.dot_general(
            wlt_ref[...], pooled_ref[...], (((1,), (1,)), ((), ())),
            preferred_element_type=jnp.float32) + bl_ref[...]
        o_ref[...] = jax.nn.sigmoid(logits)


def pool_head(h2, bid_row, invc, wl_t, bl, *, tp, g_pad):
    n_pad, c_pad = h2.shape
    grid = (n_pad // tp,)
    flops = 2 * n_pad * g_pad * c_pad + 2 * g_pad * c_pad
    bytes_accessed = h2.size * h2.dtype.itemsize + bid_row.size * 4 + g_pad * 8

    return pl.pallas_call(
        pool_head_kernel,
        out_shape=jax.ShapeDtypeStruct((1, g_pad), jnp.float32),
        grid_spec=pltpu.PrefetchScalarGridSpec(
            num_scalar_prefetch=0,
            grid=grid,
            in_specs=[
                pl.BlockSpec((tp, c_pad), lambda i: (i, 0)),    # H2 row tile
                pl.BlockSpec((1, tp), lambda i: (0, i)),        # graph ids (row)
                pl.BlockSpec((g_pad, 1), lambda i: (0, 0)),     # 1/|graph|
                pl.BlockSpec((1, c_pad), lambda i: (0, 0)),     # Wl^T resident
                pl.BlockSpec((1, 1), lambda i: (0, 0)),         # bl resident
            ],
            out_specs=pl.BlockSpec((1, g_pad), lambda i: (0, 0)),
            scratch_shapes=[pltpu.VMEM((g_pad, c_pad), jnp.float32)],
        ),
        compiler_params=pltpu.CompilerParams(
            dimension_semantics=("arbitrary",),
            vmem_limit_bytes=_vmem_limit_bytes(),
        ),
        cost_estimate=pl.CostEstimate(flops=int(flops), transcendentals=g_pad,
                                      bytes_accessed=int(bytes_accessed)),
    )(h2, bid_row, invc, wl_t, bl)


# ---------------------------------------------------------------------------
# Wrapper: plain-JAX graph densification + the three pallas_calls
# ---------------------------------------------------------------------------
def gcn_pred_forward(x, edge_index, batch, params, num_graphs, *,
                     tm=512, tk=2048):
    n, f_in = x.shape
    w1, b1, w2, b2, wl, bl = params
    hid = w1.shape[1]
    out_c = w2.shape[1]
    c_pad = _C_PAD
    assert hid <= c_pad and out_c <= c_pad

    # --- tile / padding geometry ---
    base = _round_up(n, 128)
    tm = min(tm, base)
    tk = min(tk, base)
    assert tm % 128 == 0 and tk % 128 == 0
    n_pad = _round_up(n, math.lcm(tm, tk))   # exact grid for any legal tile pair
    g_pad = _round_up(max(num_graphs, 1), 128)
    tp = tm                                   # n_pad is a multiple of tm

    # --- graph densification (data-dependent scatter: plain-JAX glue) ---
    # Raw 0/1 adjacency (+ self loops), built *directly* as a padded int8
    # buffer (no (n_pad, n_pad) f32 temporary).  A[dst, src] (PyG convention).
    src, dst = edge_index[0], edge_index[1]
    loop = jnp.arange(n, dtype=edge_index.dtype)
    src = jnp.concatenate([src, loop])
    dst = jnp.concatenate([dst, loop])
    a_i8 = jnp.zeros((n_pad, n_pad), jnp.int8).at[dst, src].add(
        jnp.ones_like(dst, dtype=jnp.int8))

    deg = jnp.sum(a_i8, axis=1, dtype=jnp.float32)
    dinv = jnp.where(deg > 0.0, lax.rsqrt(deg), 0.0)   # padded rows/cols stay 0
    dinv_rows = dinv.reshape(n_pad, 1)

    # --- lane-dense (c_pad = 128) parameter padding ---
    w1p = jnp.zeros((f_in, c_pad), jnp.float32).at[:, :hid].set(w1)
    b1p = jnp.zeros((1, c_pad), jnp.float32).at[0, :hid].set(b1.reshape(-1))
    w2p = jnp.zeros((c_pad, c_pad), jnp.float32).at[:hid, :out_c].set(w2)
    b2p = jnp.zeros((1, c_pad), jnp.float32).at[0, :out_c].set(b2.reshape(-1))
    wlt = jnp.zeros((1, c_pad), jnp.float32).at[0, :out_c].set(wl.reshape(-1))
    blp = bl.reshape(1, 1).astype(jnp.float32)

    # X @ W1 hoisted out of the kernel, with the D^-1/2 *column* scaling of the
    # adjacency pre-folded into its rows; kept fully VMEM-resident in-kernel.
    x_p = jnp.zeros((n_pad, f_in), jnp.float32).at[:n, :].set(x)
    xw1 = (dinv_rows * (x_p @ w1p)).astype(jnp.bfloat16)

    # layer 1 (+ fused H1 @ W2): emits dinv * (relu(...) @ W2) — layer 2's
    # pre-scaled resident operand.  H1 never touches HBM.
    xw2 = gcn_layer(a_i8, dinv_rows, xw1, b1p, w_next=w2p, tm=tm, tk=tk)
    # layer 2: emits H2 = relu(A_hat @ (H1 W2) + b2)
    h2 = gcn_layer(a_i8, dinv_rows, xw2, b2p, w_next=None, tm=tm, tk=tk)

    # --- fused mean-pool + linear + sigmoid (dropout = identity in eval) ---
    bid_row = jnp.full((1, n_pad), -1, jnp.int32).at[0, :n].set(
        batch.astype(jnp.int32))
    counts = jnp.zeros((num_graphs,), jnp.float32).at[batch].add(1.0)
    invc = jnp.zeros((g_pad, 1), jnp.float32).at[:num_graphs, 0].set(
        1.0 / jnp.maximum(counts, 1.0))

    out = pool_head(h2, bid_row, invc, wlt, blp, tp=tp, g_pad=g_pad)
    return out[0, :num_graphs]


def reference_forward(x, edge_index, batch, params, num_graphs):
    """Pure f32 JAX reference of the module (eval mode)."""
    w1, b1, w2, b2, wl, bl = params
    n = x.shape[0]
    src, dst = edge_index[0], edge_index[1]
    loop = jnp.arange(n, dtype=edge_index.dtype)
    src = jnp.concatenate([src, loop])
    dst = jnp.concatenate([dst, loop])
    a = jnp.zeros((n, n), jnp.float32).at[dst, src].add(1.0)
    deg = a.sum(axis=1)
    dinv = 1.0 / jnp.sqrt(deg)
    a_hat = dinv[:, None] * a * dinv[None, :]
    h = jnp.maximum(a_hat @ (x @ w1) + b1, 0.0)
    h = jnp.maximum(a_hat @ (h @ w2) + b2, 0.0)
    onehot = (batch[None, :] == jnp.arange(num_graphs)[:, None]).astype(jnp.float32)
    p = onehot / onehot.sum(axis=1, keepdims=True)
    pooled = p @ h
    return jax.nn.sigmoid(pooled @ wl + bl).reshape(-1)


if __name__ == "__main__":
    # Shapes consistent with the module:
    #   num_node_features=8, hidden_channels=32, out_channels=16, dropout=0.5
    N, F_IN, HID, OUT, G = 320, 8, 32, 16, 2

    key = jax.random.PRNGKey(0)
    kx, k1, k2, k3, k4, k5, k6 = jax.random.split(key, 7)

    x = jax.random.normal(kx, (N, F_IN), jnp.float32)

    # deterministic graph: two graphs of 160 nodes each, bidirectional ring
    src_list, dst_list = [], []
    for g in range(G):
        base = g * (N // G)
        for i in range(N // G):
            a_i = base + i
            b_i = base + (i + 1) % (N // G)
            src_list += [a_i, b_i]
            dst_list += [b_i, a_i]
    edge_index = jnp.array([src_list, dst_list], dtype=jnp.int32)
    batch = jnp.repeat(jnp.arange(G, dtype=jnp.int32), N // G)

    # deterministic synthetic parameters
    w1 = jax.random.normal(k1, (F_IN, HID), jnp.float32) * (1.0 / jnp.sqrt(F_IN))
    b1 = jax.random.normal(k2, (1, HID), jnp.float32) * 0.01
    w2 = jax.random.normal(k3, (HID, OUT), jnp.float32) * (1.0 / jnp.sqrt(HID))
    b2 = jax.random.normal(k4, (1, OUT), jnp.float32) * 0.01
    wl = jax.random.normal(k5, (OUT, 1), jnp.float32) * (1.0 / jnp.sqrt(OUT))
    bl = jax.random.normal(k6, (1, 1), jnp.float32) * 0.01
    params = (w1, b1, w2, b2, wl, bl)

    # tm=tk=128 at N=320 -> n_pad=384: exercises a 3x3 layer grid (k-reduction
    # init/accumulate/finalize, resident-XW dynamic slicing) and a 3-step
    # pooled accumulation.  Production defaults are tm=512, tk=2048.
    out = gcn_pred_forward(x, edge_index, batch, params, num_graphs=G,
                           tm=128, tk=128)
    out = jax.block_until_ready(out)

    ref = reference_forward(x, edge_index, batch, params, num_graphs=G)

    assert out.shape == (G,)
    assert bool(jnp.all(jnp.isfinite(out)))
    assert bool(jnp.allclose(out, ref, atol=5e-2, rtol=5e-2)), (out, ref)
    print("KERNEL_OK")
</pallas_src>

<mosaic_0001>
module attributes {stable_mosaic.version = 11 : i64} {
  func.func @kernel(%arg0: i32, %arg1: i32, %arg2: memref<128x128xi8, #tpu.memory_space<vmem>>, %arg3: memref<128x1xf32, #tpu.memory_space<vmem>>, %arg4: memref<384x128xbf16, #tpu.memory_space<vmem>>, %arg5: memref<1x128xf32, #tpu.memory_space<vmem>>, %arg6: memref<128x128xf32, #tpu.memory_space<vmem>>, %arg7: memref<128x128xbf16, #tpu.memory_space<vmem>>, %arg8: memref<128x128xf32, #tpu.memory_space<vmem>>) attributes {dimension_semantics = [#tpu.dimension_semantics<parallel>, #tpu.dimension_semantics<arbitrary>], iteration_bounds = array<i64: 3, 3>, scalar_prefetch = 0 : i64, scratch_operands = 1 : i64, tpu.core_type = #tpu.core_type<tc>, window_params = [{transform_indices = @transform_0, window_bounds = array<i64: 128, 128>}, {transform_indices = @transform_1, window_bounds = array<i64: 128, 1>}, {pipeline_mode = #tpu.pipeline_mode<synchronous>, transform_indices = @transform_2, window_bounds = array<i64: 384, 128>}, {pipeline_mode = #tpu.pipeline_mode<synchronous>, transform_indices = @transform_3, window_bounds = array<i64: 1, 128>}, {pipeline_mode = #tpu.pipeline_mode<synchronous>, transform_indices = @transform_4, window_bounds = array<i64: 128, 128>}, {transform_indices = @transform_5, window_bounds = array<i64: 128, 128>}]} {
    %c0_i32 = arith.constant 0 : i32
    %0 = arith.cmpi eq, %arg1, %c0_i32 : i32
    %1 = arith.extui %0 : i1 to i32
    %c0_i32_0 = arith.constant 0 : i32
    %2 = arith.cmpi ne, %1, %c0_i32_0 : i32
    scf.if %2 {
      %cst_8 = arith.constant 0.000000e+00 : f32
      %17 = vector.broadcast %cst_8 : f32 to vector<128x128xf32>
      %c0_9 = arith.constant 0 : index
      %c0_10 = arith.constant 0 : index
      %18 = vector.load %arg8[%c0_9, %c0_10] : memref<128x128xf32, #tpu.memory_space<vmem>>, vector<128x128xf32>
      tpu.vector_store %arg8[%c0_9, %c0_10], %17 {strides = array<i32>} : memref<128x128xf32, #tpu.memory_space<vmem>>, vector<128x128xf32>,
    } else {
    }
    %c128_i32 = arith.constant 128 : i32
    %3 = arith.muli %arg1, %c128_i32 : i32
    %4 = tpu.assume_multiple %3, 128 : i32
    %5 = arith.index_cast %4 : i32 to index
    %c0 = arith.constant 0 : index
    %6 = vector.load %arg4[%5, %c0] : memref<384x128xbf16, #tpu.memory_space<vmem>>, vector<128x128xbf16>
    %c0_1 = arith.constant 0 : index
    %c0_2 = arith.constant 0 : index
    %7 = vector.load %arg2[%c0_1, %c0_2] : memref<128x128xi8, #tpu.memory_space<vmem>>, vector<128x128xi8>
    %8 = arith.sitofp %7 : vector<128x128xi8> to vector<128x128xf32>
    %9 = arith.truncf %8 : vector<128x128xf32> to vector<128x128xbf16>
    %c0_3 = arith.constant 0 : index
    %c0_4 = arith.constant 0 : index
    %10 = vector.load %arg8[%c0_3, %c0_4] : memref<128x128xf32, #tpu.memory_space<vmem>>, vector<128x128xf32>
    %cst = arith.constant dense<0.000000e+00> : vector<128x128xf32>
    %11 = tpu.matmul %9, %6, %cst {dimension_numbers = #tpu.dot_dimension_numbers<[1], [0], [0], [1], [0, 0, 1, 1], [], []>} : vector<128x128xbf16>, vector<128x128xbf16>, vector<128x128xf32> -> vector<128x128xf32>
    %12 = arith.addf %10, %11 : vector<128x128xf32>
    %c0_5 = arith.constant 0 : index
    %c0_6 = arith.constant 0 : index
    %13 = vector.load %arg8[%c0_5, %c0_6] : memref<128x128xf32, #tpu.memory_space<vmem>>, vector<128x128xf32>
    tpu.vector_store %arg8[%c0_5, %c0_6], %12 {strides = array<i32>} : memref<128x128xf32, #tpu.memory_space<vmem>>, vector<128x128xf32>,
    %c2_i32 = arith.constant 2 : i32
    %14 = arith.cmpi eq, %arg1, %c2_i32 : i32
    %15 = arith.extui %14 : i1 to i32
    %c0_i32_7 = arith.constant 0 : i32
    %16 = arith.cmpi ne, %15, %c0_i32_7 : i32
    scf.if %16 {
      %c0_8 = arith.constant 0 : index
      %c0_9 = arith.constant 0 : index
      %17 = vector.load %arg3[%c0_8, %c0_9] : memref<128x1xf32, #tpu.memory_space<vmem>>, vector<128x1xf32>
      %c0_10 = arith.constant 0 : index
      %c0_11 = arith.constant 0 : index
      %18 = vector.load %arg8[%c0_10, %c0_11] : memref<128x128xf32, #tpu.memory_space<vmem>>, vector<128x128xf32>
      %19 = vector.broadcast %17 : vector<128x1xf32> to vector<128x128xf32>
      %20 = arith.mulf %19, %18 : vector<128x128xf32>
      %c0_12 = arith.constant 0 : index
      %c0_13 = arith.constant 0 : index
      %21 = vector.load %arg5[%c0_12, %c0_13] : memref<1x128xf32, #tpu.memory_space<vmem>>, vector<1x128xf32>
      %22 = vector.broadcast %21 : vector<1x128xf32> to vector<128x128xf32>
      %23 = arith.addf %20, %22 : vector<128x128xf32>
      %cst_14 = arith.constant 0.000000e+00 : f32
      %24 = vector.broadcast %cst_14 : f32 to vector<128x128xf32>
      %25 = arith.maximumf %23, %24 : vector<128x128xf32>
      %c0_15 = arith.constant 0 : index
      %c0_16 = arith.constant 0 : index
      %26 = vector.load %arg6[%c0_15, %c0_16] : memref<128x128xf32, #tpu.memory_space<vmem>>, vector<128x128xf32>
      %cst_17 = arith.constant dense<0.000000e+00> : vector<128x128xf32>
      %27 = tpu.matmul %25, %26, %cst_17 {dimension_numbers = #tpu.dot_dimension_numbers<[1], [0], [0], [1], [0, 0, 1, 1], [], []>} : vector<128x128xf32>, vector<128x128xf32>, vector<128x128xf32> -> vector<128x128xf32>
      %c0_18 = arith.constant 0 : index
      %c0_19 = arith.constant 0 : index
      %28 = vector.load %arg3[%c0_18, %c0_19] : memref<128x1xf32, #tpu.memory_space<vmem>>, vector<128x1xf32>
      %29 = vector.broadcast %28 : vector<128x1xf32> to vector<128x128xf32>
      %30 = arith.mulf %29, %27 : vector<128x128xf32>
      %31 = arith.truncf %30 : vector<128x128xf32> to vector<128x128xbf16>
      %c0_20 = arith.constant 0 : index
      %c0_21 = arith.constant 0 : index
      %32 = vector.load %arg7[%c0_20, %c0_21] : memref<128x128xbf16, #tpu.memory_space<vmem>>, vector<128x128xbf16>
      tpu.vector_store %arg7[%c0_20, %c0_21], %31 {strides = array<i32>} : memref<128x128xbf16, #tpu.memory_space<vmem>>, vector<128x128xbf16>,
    } else {
    }
    return
  }
  func.func @transform_0(%arg0: i32, %arg1: i32) -> (i32, i32) {
    %c0_i32 = arith.constant 0 : i32
    return %arg0, %arg1 : i32, i32
  }
  func.func @transform_1(%arg0: i32, %arg1: i32) -> (i32, i32) {
    %c0_i32 = arith.constant 0 : i32
    %c0_i32_0 = arith.constant 0 : i32
    return %arg0, %c0_i32 : i32, i32
  }
  func.func @transform_2(%arg0: i32, %arg1: i32) -> (i32, i32) {
    %c0_i32 = arith.constant 0 : i32
    %c0_i32_0 = arith.constant 0 : i32
    %c0_i32_1 = arith.constant 0 : i32
    return %c0_i32, %c0_i32_0 : i32, i32
  }
  func.func @transform_3(%arg0: i32, %arg1: i32) -> (i32, i32) {
    %c0_i32 = arith.constant 0 : i32
    %c0_i32_0 = arith.constant 0 : i32
    %c0_i32_1 = arith.constant 0 : i32
    return %c0_i32, %c0_i32_0 : i32, i32
  }
  func.func @transform_4(%arg0: i32, %arg1: i32) -> (i32, i32) {
    %c0_i32 = arith.constant 0 : i32
    %c0_i32_0 = arith.constant 0 : i32
    %c0_i32_1 = arith.constant 0 : i32
    return %c0_i32, %c0_i32_0 : i32, i32
  }
  func.func @transform_5(%arg0: i32, %arg1: i32) -> (i32, i32) {
    %c0_i32 = arith.constant 0 : i32
    %c0_i32_0 = arith.constant 0 : i32
    return %arg0, %c0_i32 : i32, i32
  }
}

</mosaic_0001>

<llo_original>
// kernel: tpu_custom_call.1
$region0: #{tpu_custom_call.1}
  #allocation0 [shape = 'u32[]', space=smem, size = 0x4, offset = 0x4, fixed_abs, tag = 'smem constant byte address 0x4 - core index']
  #allocation1 [shape = 'u32[144,128]{1,0:T(1,128)}', space=vmem, size = 0x12000, scoped, tag = 'internal scratch']
  #allocation2 [shape = 'f32[128,128]{1,0:T(8,128)}', space=vmem, size = 0x10000, scoped, tag = 'scratch operand']
  %s0 = inlined_call_operand.vmem [shape: s8[384,384], index: 0, kind: input, shape index: {}]
  %s1 = inlined_call_operand.vmem [shape: f32[384,1], index: 1, kind: input, shape index: {}]
  %s2 = inlined_call_operand.hbm [shape: bf16[384,128], index: 2, kind: input, shape index: {}]
  %s3 = inlined_call_operand.vmem [shape: f32[1,128], index: 3, kind: input, shape index: {}]
  %s4 = inlined_call_operand.hbm [shape: f32[128,128], index: 4, kind: input, shape index: {}]
  %s5 = inlined_call_operand.hbm [shape: bf16[384,128], index: 5, kind: output, shape index: {}]
  %s6 = sld [smem:[#allocation0]]
  $region107: #{tpu_custom_call.1} parent=0
    _
  %s8 = ssub.s32 1, %s6
  %s9 = scalar_select 0, %s8, %s6
  $region1: #{tpu_custom_call.1} parent=0
    #allocation3 [shape = 'u8[32768]{0}', space=vmem, size = 0x8000, scoped, tag = 'input window, operand 0']
    #allocation4 [shape = 'u8[98304]{0}', space=vmem, size = 0x18000, scoped, tag = 'input window, operand 2, single buffered']
    #allocation5 [shape = 's32[2]{0}', space=sflag, size = 0x8, scoped, tag = 'scoped memory for tpu_custom_call.1']
    #allocation6 [shape = 's32[2]{0}', space=sflag, size = 0x8, scoped, tag = 'scoped memory for tpu_custom_call.1']
    #allocation7 [shape = 'u8[65536]{0}', space=vmem, size = 0x10000, scoped, tag = 'input window, operand 4, single buffered']
    #allocation8 [shape = 's32[1]{0}', space=sflag, size = 0x4, scoped, tag = 'scoped memory for tpu_custom_call.1']
    #allocation9 [shape = 'u8[65536]{0}', space=vmem, size = 0x10000, scoped, tag = 'output window, operand 0']
    %10 = vsyncpa [#allocation5], 0
    %11 = vsyncpa [#allocation8], 0
    %12 = vsyncpa [#allocation6], 0
    %s13 = scalar_lea.sflag [#allocation6], 1
    %14 = vsyncpa %s13, 0
    loop: start=0, step=1, limit=11
    $region2: #{tpu_custom_call.1} parent=1 // loop_pre_header
      _
    $region3: #{tpu_custom_call.1} parent=1 // loop_header
      %s16 = sphi 0, %s20
      %p17 = scmp.ge.s32.totalorder %s16, 11
      %s23 = sphi 0, %s35
      %s24 = sphi 0, %s31
      %s25 = sphi 0, %s23
      %s26 = sphi 0, %s24
      %s27 = sphi 0, %s25
      %s28 = sphi 0, %s26
      %s40 = sphi 0, %s42
      %s43 = sphi 0, %s40
      %s44 = sphi 0, %s43
      %s60 = sphi 0, %s44
      %s66 = sphi 0, %s68
      %s69 = sphi 0, %s66
      %s70 = sphi 0, %s69
      %s86 = sphi 0, %s70
      %s90 = sphi 0, %s90
      %s92 = sphi 0, %s90
      %s93 = sphi 0, %s92
      %s107 = sphi 0, %s93
      %s111 = sphi 0, %s111
      %s113 = sphi 0, %s111
      %s114 = sphi 0, %s113
      %s128 = sphi 0, %s114
      %s132 = sphi 0, %s132
      %s134 = sphi 0, %s132
      %s135 = sphi 0, %s134
      %s149 = sphi 0, %s135
      %s155 = sphi 0, %s157
      %s158 = sphi 0, %s155
      %s159 = sphi 0, %s158
      %s175 = sphi 0, %s159
    $region4: #{tpu_custom_call.1} parent=1 // loop_header_branch
      %19 = sbr.rel (%p17) target = $region8
    $region5: #{tpu_custom_call.1} parent=1 // loop_body
      %s21 = ssub.s32 %s16, 1
      %s22 = ssub.s32 %s16, 2
      %s29 = sadd.s32 1, %s24
      %p30 = scmp.ge.s32.totalorder %s29, 3
      %s31 = scalar_select %p30, 0, %s29
      %s32 = sadd.s32 1, %s23
      %s33 = scalar_select %p30, %s32, %s23
      %p34 = scmp.ge.s32.totalorder %s33, 3
      %s35 = scalar_select %p34, 0, %s33
      %s36 = ssub.s32 %s23, %s35
      %s37 = ssub.s32 %s24, %s31
      %s38 = sor.u32 %s36, %s37
      %p39 = scmp.eq.s32.totalorder %s38, 0
      %s41 = sadd.s32 %s40, 1
      %s42 = scalar_select %p39, %s40, %s41
      %p45 = pneg %p39
      %p46 = scmp.eq.s32.totalorder %s16, 8
      %p47 = por %p45, %p46
      %p48 = scmp.ne.s32.totalorder %s40, %s43
      %p49 = scmp.eq.s32.totalorder %s16, 0
      %p50 = por %p48, %p49
      %p51 = scmp.ne.s32.totalorder %s40, %s43
      %p52 = scmp.eq.s32.totalorder %s21, 8
      %p53 = por %p51, %p52
      %p54 = scmp.ne.s32.totalorder %s43, %s44
      %p55 = scmp.eq.s32.totalorder %s21, 0
      %p56 = por %p54, %p55
      %p57 = scmp.ne.s32.totalorder %s43, %s44
      %p58 = scmp.eq.s32.totalorder %s22, 8
      %p59 = por %p57, %p58
      %p61 = scmp.ne.s32.totalorder %s44, %s60
      %p62 = scmp.eq.s32.totalorder %s22, 0
      %p63 = por %p61, %p62
      %s64 = ssub.s32 %s23, %s35
      %p65 = scmp.eq.s32.totalorder %s64, 0
      %s67 = sadd.s32 %s66, 1
      %s68 = scalar_select %p65, %s66, %s67
      %p71 = pneg %p65
      %p72 = scmp.eq.s32.totalorder %s16, 8
      %p73 = por %p71, %p72
      %p74 = scmp.ne.s32.totalorder %s66, %s69
      %p75 = scmp.eq.s32.totalorder %s16, 0
      %p76 = por %p74, %p75
      %p77 = scmp.ne.s32.totalorder %s66, %s69
      %p78 = scmp.eq.s32.totalorder %s21, 8
      %p79 = por %p77, %p78
      %p80 = scmp.ne.s32.totalorder %s69, %s70
      %p81 = scmp.eq.s32.totalorder %s21, 0
      %p82 = por %p80, %p81
      %p83 = scmp.ne.s32.totalorder %s69, %s70
      %p84 = scmp.eq.s32.totalorder %s22, 8
      %p85 = por %p83, %p84
      %p87 = scmp.ne.s32.totalorder %s70, %s86
      %p88 = scmp.eq.s32.totalorder %s22, 0
      %p89 = por %p87, %p88
      %s91 = sadd.s32 %s90, 1
      %p94 = scmp.eq.s32.totalorder %s16, 8
      %p95 = scmp.ne.s32.totalorder %s90, %s92
      %p96 = scmp.eq.s32.totalorder %s16, 0
      %p97 = por %p95, %p96
      %p98 = scmp.ne.s32.totalorder %s90, %s92
      %p99 = scmp.eq.s32.totalorder %s21, 8
      %p100 = por %p98, %p99
      %p101 = scmp.ne.s32.totalorder %s92, %s93
      %p102 = scmp.eq.s32.totalorder %s21, 0
      %p103 = por %p101, %p102
      %p104 = scmp.ne.s32.totalorder %s92, %s93
      %p105 = scmp.eq.s32.totalorder %s22, 8
      %p106 = por %p104, %p105
      %p108 = scmp.ne.s32.totalorder %s93, %s107
      %p109 = scmp.eq.s32.totalorder %s22, 0
      %p110 = por %p108, %p109
      %s112 = sadd.s32 %s111, 1
      %p115 = scmp.eq.s32.totalorder %s16, 8
      %p116 = scmp.ne.s32.totalorder %s111, %s113
      %p117 = scmp.eq.s32.totalorder %s16, 0
      %p118 = por %p116, %p117
      %p119 = scmp.ne.s32.totalorder %s111, %s113
      %p120 = scmp.eq.s32.totalorder %s21, 8
      %p121 = por %p119, %p120
      %p122 = scmp.ne.s32.totalorder %s113, %s114
      %p123 = scmp.eq.s32.totalorder %s21, 0
      %p124 = por %p122, %p123
      %p125 = scmp.ne.s32.totalorder %s113, %s114
      %p126 = scmp.eq.s32.totalorder %s22, 8
      %p127 = por %p125, %p126
      %p129 = scmp.ne.s32.totalorder %s114, %s128
      %p130 = scmp.eq.s32.totalorder %s22, 0
      %p131 = por %p129, %p130
      %s133 = sadd.s32 %s132, 1
      %p136 = scmp.eq.s32.totalorder %s16, 8
      %p137 = scmp.ne.s32.totalorder %s132, %s134
      %p138 = scmp.eq.s32.totalorder %s16, 0
      %p139 = por %p137, %p138
      %p140 = scmp.ne.s32.totalorder %s132, %s134
      %p141 = scmp.eq.s32.totalorder %s21, 8
      %p142 = por %p140, %p141
      %p143 = scmp.ne.s32.totalorder %s134, %s135
      %p144 = scmp.eq.s32.totalorder %s21, 0
      %p145 = por %p143, %p144
      %p146 = scmp.ne.s32.totalorder %s134, %s135
      %p147 = scmp.eq.s32.totalorder %s22, 8
      %p148 = por %p146, %p147
      %p150 = scmp.ne.s32.totalorder %s135, %s149
      %p151 = scmp.eq.s32.totalorder %s22, 0
      %p152 = por %p150, %p151
      %s153 = ssub.s32 %s23, %s35
      %p154 = scmp.eq.s32.totalorder %s153, 0
      %s156 = sadd.s32 %s155, 1
      %s157 = scalar_select %p154, %s155, %s156
      %p160 = pneg %p154
      %p161 = scmp.eq.s32.totalorder %s16, 8
      %p162 = por %p160, %p161
      %p163 = scmp.ne.s32.totalorder %s155, %s158
      %p164 = scmp.eq.s32.totalorder %s16, 0
      %p165 = por %p163, %p164
      %p166 = scmp.ne.s32.totalorder %s155, %s158
      %p167 = scmp.eq.s32.totalorder %s21, 8
      %p168 = por %p166, %p167
      %p169 = scmp.ne.s32.totalorder %s158, %s159
      %p170 = scmp.eq.s32.totalorder %s21, 0
      %p171 = por %p169, %p170
      %p172 = scmp.ne.s32.totalorder %s158, %s159
      %p173 = scmp.eq.s32.totalorder %s22, 8
      %p174 = por %p172, %p173
      %p176 = scmp.ne.s32.totalorder %s159, %s175
      %p177 = scmp.eq.s32.totalorder %s22, 0
      %p178 = por %p176, %p177
      %p179 = scmp.le.s32.totalorder 1, %s16
      %p180 = scmp.lt.s32.totalorder %s16, 10
      %p181 = pnand %p179, %p180
      %p182 = pneg %p181
      // Predicated region
      $region9: #{tpu_custom_call.1} parent=5 // pred_check
        _
      $region10: #{tpu_custom_call.1} parent=5 // pred_check_branch
        %184 = sbr.rel (%p181) target = $region12
      $region11: #{tpu_custom_call.1} parent=5 // pred_region
        %s185 = ssub.s32 %s16, 1
        // Predicated region
        $region13: #{tpu_custom_call.1} parent=11 // pred_check
          %p186 = pneg %p103
        $region14: #{tpu_custom_call.1} parent=11 // pred_check_branch
          %188 = sbr.rel (%p186) target = $region16
        $region15: #{tpu_custom_call.1} parent=11 // pred_region
          %s190 = ssub.s32 3072, 3072
          %191 = vsyncadd [#allocation5], %s190
          %s192 = sshll.u32 [#allocation4], 4
          %s193 = int_to_ptr.vmem [resolvable:$true] %s192
          %198 = dma.hbm_to_vmem [thread:$0]  %s2, 3072, %s193, [#allocation5], 64, 64, 4
        $region16: #{tpu_custom_call.1} parent=11 // pred_fallthru
          _
        // Predicated region
        $region17: #{tpu_custom_call.1} parent=11 // pred_check
          %p199 = pneg %p124
        $region18: #{tpu_custom_call.1} parent=11 // pred_check_branch
          %201 = sbr.rel (%p199) target = $region20
        $region19: #{tpu_custom_call.1} parent=11 // pred_region
          _
        $region20: #{tpu_custom_call.1} parent=11 // pred_fallthru
          _
        // Predicated region
        $region21: #{tpu_custom_call.1} parent=11 // pred_check
          %p202 = pneg %p145
        $region22: #{tpu_custom_call.1} parent=11 // pred_check_branch
          %204 = sbr.rel (%p202) target = $region24
        $region23: #{tpu_custom_call.1} parent=11 // pred_region
          %s206 = ssub.s32 2048, 2048
          %207 = vsyncadd [#allocation8], %s206
          %s208 = sshll.u32 [#allocation7], 4
          %s209 = int_to_ptr.vmem [resolvable:$true] %s208
          %214 = dma.hbm_to_vmem [thread:$0]  %s4, 2048, %s209, [#allocation8], 128, 128, 8
        $region24: #{tpu_custom_call.1} parent=11 // pred_fallthru
          _
      $region12: #{tpu_custom_call.1} parent=5 // pred_fallthru
        _
      %p215 = scmp.lt.s32.totalorder %s16, 9
      // Predicated region
      $region25: #{tpu_custom_call.1} parent=5 // pred_check
        %p216 = pneg %p215
      $region26: #{tpu_custom_call.1} parent=5 // pred_check_branch
        %218 = sbr.rel (%p216) target = $region28
      $region27: #{tpu_custom_call.1} parent=5 // pred_region
        // Predicated region
        $region29: #{tpu_custom_call.1} parent=27 // pred_check
          %p219 = pneg %p50
        $region30: #{tpu_custom_call.1} parent=27 // pred_check_branch
          %221 = sbr.rel (%p219) target = $region32
        $region31: #{tpu_custom_call.1} parent=27 // pred_region
          %s222 = sand.u32 %s40, 1
          %s223 = sand.u32 %s40, 1
          %s224 = smul.addr %s223, 32
          %s225 = scalar_lea.vmem [#allocation3], %s224
          %s226 = smul.u32 4, %s23
          %s227 = smul.addr %s226, 3
          %s228 = sadd.s32 %s24, %s227
          %s229 = smul.addr %s228, 8
          %s230 = scalar_lea.vmem %s0, %s229
          // Predicated region
          $region33: #{tpu_custom_call.1} parent=31 // pred_check
            _
          $region34: #{tpu_custom_call.1} parent=31 // pred_check_branch
            %232 = sbr.rel (0) target = $region36
          $region35: #{tpu_custom_call.1} parent=31 // pred_region
            // Predicated region
            $region37: #{tpu_custom_call.1} parent=35 // pred_check
              _
            $region38: #{tpu_custom_call.1} parent=35 // pred_check_branch
              %234 = sbr.rel (0) target = $region40
            $region39: #{tpu_custom_call.1} parent=35 // pred_region
              // Predicated region
              $region52: #{tpu_custom_call.1} parent=39 // pred_check
                _
              $region53: #{tpu_custom_call.1} parent=39 // pred_check_branch
                %256 = sbr.rel (0) target = $region55
              $region54: #{tpu_custom_call.1} parent=39 // pred_region
                loop: start=0, step=1, limit=1
                $region56: #{tpu_custom_call.1} parent=54 // loop_pre_header
                  _
                $region57: #{tpu_custom_call.1} parent=54 // loop_header
                  %s258 = sphi 0, %s262
                  %p259 = scmp.ge.s32.totalorder %s258, 1
                  %s263 = sphi %s230, %s230
                  %s264 = sphi %s225, %s225
                $region58: #{tpu_custom_call.1} parent=54 // loop_header_branch
                  %261 = sbr.rel (%p259) target = $region62
                $region59: #{tpu_custom_call.1} parent=54 // loop_body
                  %v265 = vld [vmem:[%s263] sm:$0xff]
                  %266 = vst [vmem:[%s264] sm:$0xff] %v265
                  %v267 = vld [vmem:[%s263 + $0x18] sm:$0xff]
                  %268 = vst [vmem:[%s264 + $0x8] sm:$0xff] %v267
                  %v269 = vld [vmem:[%s263 + $0x30] sm:$0xff]
                  %270 = vst [vmem:[%s264 + $0x10] sm:$0xff] %v269
                  %v271 = vld [vmem:[%s263 + $0x48] sm:$0xff]
                  %272 = vst [vmem:[%s264 + $0x18] sm:$0xff] %v271
                $region60: #{tpu_custom_call.1} parent=54 // loop_footer
                  %s262 = sadd.s32 1, %s258
                $region61: #{tpu_custom_call.1} parent=54 // loop_footer_branch
                  %257 = sbr.rel target = $region57
                $region62: #{tpu_custom_call.1} parent=54 // loop_exit
                  _
              $region55: #{tpu_custom_call.1} parent=39 // pred_fallthru
                _
              // Predicated region
              $region63: #{tpu_custom_call.1} parent=39 // pred_check
                _
              $region64: #{tpu_custom_call.1} parent=39 // pred_check_branch
                %274 = sbr.rel target = $region66
              $region65: #{tpu_custom_call.1} parent=39 // pred_region
                _
              $region66: #{tpu_custom_call.1} parent=39 // pred_fallthru
                _
            $region40: #{tpu_custom_call.1} parent=35 // pred_fallthru
              _
            // Predicated region
            $region41: #{tpu_custom_call.1} parent=35 // pred_check
              _
            $region42: #{tpu_custom_call.1} parent=35 // pred_check_branch
              %236 = sbr.rel target = $region44
            $region43: #{tpu_custom_call.1} parent=35 // pred_region
              %s238 = ssub.s32 256, 1
              loop: start=0, step=1, limit=1
              $region45: #{tpu_custom_call.1} parent=43 // loop_pre_header
                _
              $region46: #{tpu_custom_call.1} parent=43 // loop_header
                %s240 = sphi 0, %s244
                %p241 = scmp.ge.s32.totalorder %s240, 1
                %s245 = sphi %s230, %s230
                %s246 = sphi %s225, %s225
              $region47: #{tpu_custom_call.1} parent=43 // loop_header_branch
                %243 = sbr.rel (%p241) target = $region51
              $region48: #{tpu_custom_call.1} parent=43 // loop_body
                %v247 = vld [vmem:[%s245] sm:%s238]
                %248 = vst [vmem:[%s246] sm:%s238] %v247
                %v249 = vld [vmem:[%s245 + $0x18] sm:%s238]
                %250 = vst [vmem:[%s246 + $0x8] sm:%s238] %v249
                %v251 = vld [vmem:[%s245 + $0x30] sm:%s238]
                %252 = vst [vmem:[%s246 + $0x10] sm:%s238] %v251
                %v253 = vld [vmem:[%s245 + $0x48] sm:%s238]
                %254 = vst [vmem:[%s246 + $0x18] sm:%s238] %v253
              $region49: #{tpu_custom_call.1} parent=43 // loop_footer
                %s244 = sadd.s32 1, %s240
              $region50: #{tpu_custom_call.1} parent=43 // loop_footer_branch
                %239 = sbr.rel target = $region46
              $region51: #{tpu_custom_call.1} parent=43 // loop_exit
                _
            $region44: #{tpu_custom_call.1} parent=35 // pred_fallthru
              _
          $region36: #{tpu_custom_call.1} parent=31 // pred_fallthru
            _
          %275 = vnop
        $region32: #{tpu_custom_call.1} parent=27 // pred_fallthru
          _
        // Predicated region
        $region67: #{tpu_custom_call.1} parent=27 // pred_check
          %p276 = pneg %p76
        $region68: #{tpu_custom_call.1} parent=27 // pred_check_branch
          %278 = sbr.rel (%p276) target = $region70
        $region69: #{tpu_custom_call.1} parent=27 // pred_region
          %s279 = smul.u32 16, %s23
          %p280 = scmp.lt.s32.totalorder %s279, 47
          %s281 = scalar_select %p280, %s279, 47
          %s282 = smul.addr %s281, 8
          %s283 = scalar_lea.vmem %s1, %s282
          %s284 = smul.u32 16, %s23
        $region70: #{tpu_custom_call.1} parent=27 // pred_fallthru
          _
      $region28: #{tpu_custom_call.1} parent=5 // pred_fallthru
        _
      %p285 = scmp.le.s32.totalorder 1, %s16
      %p286 = scmp.lt.s32.totalorder %s16, 10
      %p287 = pnand %p285, %p286
      %p288 = pneg %p287
      // Predicated region
      $region71: #{tpu_custom_call.1} parent=5 // pred_check
        _
      $region72: #{tpu_custom_call.1} parent=5 // pred_check_branch
        %290 = sbr.rel (%p287) target = $region74
      $region73: #{tpu_custom_call.1} parent=5 // pred_region
        %s291 = ssub.s32 %s16, 1
        %s292 = sand.u32 %s43, 1
        %s293 = sand.u32 %s43, 1
        %s294 = smul.addr %s293, 32
        %s295 = scalar_lea.vmem [#allocation3], %s294
        // Predicated region
        $region75: #{tpu_custom_call.1} parent=73 // pred_check
          %p296 = pneg %p56
        $region76: #{tpu_custom_call.1} parent=73 // pred_check_branch
          %298 = sbr.rel (%p296) target = $region78
        $region77: #{tpu_custom_call.1} parent=73 // pred_region
          _
        $region78: #{tpu_custom_call.1} parent=73 // pred_fallthru
          _
        // Predicated region
        $region79: #{tpu_custom_call.1} parent=73 // pred_check
          %p299 = pneg %p103
        $region80: #{tpu_custom_call.1} parent=73 // pred_check_branch
          %301 = sbr.rel (%p299) target = $region82
        $region81: #{tpu_custom_call.1} parent=73 // pred_region
          %302 = dma.done [#allocation5], 3072
        $region82: #{tpu_custom_call.1} parent=73 // pred_fallthru
          _
        // Predicated region
        $region83: #{tpu_custom_call.1} parent=73 // pred_check
          %p303 = pneg %p145
        $region84: #{tpu_custom_call.1} parent=73 // pred_check_branch
          %305 = sbr.rel (%p303) target = $region86
        $region85: #{tpu_custom_call.1} parent=73 // pred_region
          %306 = dma.done [#allocation8], 2048
        $region86: #{tpu_custom_call.1} parent=73 // pred_fallthru
          _
        %s307 = sand.u32 %s43, 1
        %s308 = sand.u32 %s43, 1
        %s309 = smul.addr %s308, 32
        %s310 = scalar_lea.vmem [#allocation3], %s309
        %p311 = pneg %p56
        %p312 = pneg %p53
        %s313 = smul.u32 16, %s25
        %p314 = scmp.lt.s32.totalorder %s313, 47
        %s315 = scalar_select %p314, %s313, 47
        %s316 = smul.addr %s315, 8
        %s317 = scalar_lea.vmem %s1, %s316
        %p318 = pneg %p82
        %p319 = pneg %p79
        %p320 = pneg %p103
        %p321 = pneg %p100
        %p322 = pneg %p124
        %p323 = pneg %p121
        %p324 = pneg %p145
        %p325 = pneg %p142
        %p326 = pneg %p171
        %p327 = pneg %p168
        %s328 = sand.u32 %s158, 1
        %s329 = scalar_lea.sflag [#allocation6], %s328
        %s330 = sand.u32 %s158, 1
        %s331 = smul.addr %s330, 64
        %s332 = scalar_lea.vmem [#allocation9], %s331
        %s333 = smul.u32 4, %s25
        %s334 = smul.u32 16, %s25
        %p335 = scmp.lt.s32.totalorder %s334, 47
        %s336 = scalar_select %p335, %s334, 47
        %s337 = smul.addr %s336, 8
        %s338 = scalar_lea.vmem %s1, %s337
        %s339 = smul.u32 16, %s25
        %s340 = smul.u32 16, %s25
        %p342 = scmp.eq.s32.totalorder %s26, 0
        // Predicated region
        $region87: #{tpu_custom_call.1} parent=73 // pred_check
          %p343 = pneg %p342
        $region88: #{tpu_custom_call.1} parent=73 // pred_check_branch
          %345 = sbr.rel (%p343) target = $region90
        $region89: #{tpu_custom_call.1} parent=73 // pred_region
          %346 = vst [vmem:[#allocation2] sm:$0xff] 0.0
          %347 = vst [vmem:[#allocation2 + $0x8] sm:$0xff] 0.0
          %348 = vst [vmem:[#allocation2 + $0x10] sm:$0xff] 0.0
          %349 = vst [vmem:[#allocation2 + $0x18] sm:$0xff] 0.0
          %350 = vst [vmem:[#allocation2 + $0x20] sm:$0xff] 0.0
          %351 = vst [vmem:[#allocation2 + $0x28] sm:$0xff] 0.0
          %352 = vst [vmem:[#allocation2 + $0x30] sm:$0xff] 0.0
          %353 = vst [vmem:[#allocation2 + $0x38] sm:$0xff] 0.0
          %354 = vst [vmem:[#allocation2 + $0x40] sm:$0xff] 0.0
          %355 = vst [vmem:[#allocation2 + $0x48] sm:$0xff] 0.0
          %356 = vst [vmem:[#allocation2 + $0x50] sm:$0xff] 0.0
          %357 = vst [vmem:[#allocation2 + $0x58] sm:$0xff] 0.0
          %358 = vst [vmem:[#allocation2 + $0x60] sm:$0xff] 0.0
          %359 = vst [vmem:[#allocation2 + $0x68] sm:$0xff] 0.0
          %360 = vst [vmem:[#allocation2 + $0x70] sm:$0xff] 0.0
          %361 = vst [vmem:[#allocation2 + $0x78] sm:$0xff] 0.0
        $region90: #{tpu_custom_call.1} parent=73 // pred_fallthru
          _
        %s362 = smul.u32 %s26, 128
        %s363 = sshra.s32 %s362, 3
        %s364 = sand.u32 %s362, 7
        %s365 = smul.addr %s363, 4
        %s366 = scalar_lea.vmem [#allocation4], %s365
        %v367 = vld [vmem:[%s366] sm:$0xf]
        %v368 = vld [vmem:[%s366 + $0x4] sm:$0xf]
        %v369 = vld [vmem:[%s366 + $0x8] sm:$0xf]
        %v370 = vld [vmem:[%s366 + $0xc] sm:$0xf]
        %v371 = vld [vmem:[%s366 + $0x10] sm:$0xf]
        %v372 = vld [vmem:[%s366 + $0x14] sm:$0xf]
        %v373 = vld [vmem:[%s366 + $0x18] sm:$0xf]
        %v374 = vld [vmem:[%s366 + $0x1c] sm:$0xf]
        %v375 = vld [vmem:[%s366 + $0x20] sm:$0xf]
        %v376 = vld [vmem:[%s366 + $0x24] sm:$0xf]
        %v377 = vld [vmem:[%s366 + $0x28] sm:$0xf]
        %v378 = vld [vmem:[%s366 + $0x2c] sm:$0xf]
        %v379 = vld [vmem:[%s366 + $0x30] sm:$0xf]
        %v380 = vld [vmem:[%s366 + $0x34] sm:$0xf]
        %v381 = vld [vmem:[%s366 + $0x38] sm:$0xf]
        %v382 = vld [vmem:[%s366 + $0x3c] sm:$0xf]
        %v383 = vld [vmem:[%s295] sm:$0xff]
        %v384 = vld [vmem:[%s295 + $0x8] sm:$0xff]
        %v385 = vld [vmem:[%s295 + $0x10] sm:$0xff]
        %v386 = vld [vmem:[%s295 + $0x18] sm:$0xff]
        %v387 = vunpack.c.l.s8.bf16 %v383
        %v388 = vunpack.c.h.s8.bf16 %v383
        %v389 = vunpack.c.l.s8.bf16 %v384
        %v390 = vunpack.c.h.s8.bf16 %v384
        %v391 = vunpack.c.l.s8.bf16 %v385
        %v392 = vunpack.c.h.s8.bf16 %v385
        %v393 = vunpack.c.l.s8.bf16 %v386
        %v394 = vunpack.c.h.s8.bf16 %v386
        %v395 = vld [vmem:[#allocation2] sm:$0xff]
        %v396 = vld [vmem:[#allocation2 + $0x8] sm:$0xff]
        %v397 = vld [vmem:[#allocation2 + $0x10] sm:$0xff]
        %v398 = vld [vmem:[#allocation2 + $0x18] sm:$0xff]
        %v399 = vld [vmem:[#allocation2 + $0x20] sm:$0xff]
        %v400 = vld [vmem:[#allocation2 + $0x28] sm:$0xff]
        %v401 = vld [vmem:[#allocation2 + $0x30] sm:$0xff]
        %v402 = vld [vmem:[#allocation2 + $0x38] sm:$0xff]
        %v403 = vld [vmem:[#allocation2 + $0x40] sm:$0xff]
        %v404 = vld [vmem:[#allocation2 + $0x48] sm:$0xff]
        %v405 = vld [vmem:[#allocation2 + $0x50] sm:$0xff]
        %v406 = vld [vmem:[#allocation2 + $0x58] sm:$0xff]
        %v407 = vld [vmem:[#allocation2 + $0x60] sm:$0xff]
        %v408 = vld [vmem:[#allocation2 + $0x68] sm:$0xff]
        %v409 = vld [vmem:[#allocation2 + $0x70] sm:$0xff]
        %v410 = vld [vmem:[#allocation2 + $0x78] sm:$0xff]
        %v427 = vunpack.c.l.b16 %v367
        %v428 = vunpack.c.l.b16 %v368
        %v429 = vunpack.c.l.b16 %v369
        %v430 = vunpack.c.l.b16 %v370
        %v431 = vunpack.c.l.b16 %v371
        %v432 = vunpack.c.l.b16 %v372
        %v433 = vunpack.c.l.b16 %v373
        %v434 = vunpack.c.l.b16 %v374
        %v435 = vunpack.c.l.b16 %v375
        %v436 = vunpack.c.l.b16 %v376
        %v437 = vunpack.c.l.b16 %v377
        %v438 = vunpack.c.l.b16 %v378
        %v439 = vunpack.c.l.b16 %v379
        %v440 = vunpack.c.l.b16 %v380
        %v441 = vunpack.c.l.b16 %v381
        %v442 = vunpack.c.l.b16 %v382
        %v443 = vpack.c.b16 %v428, %v427
        %v444 = vpack.c.b16 %v430, %v429
        %v445 = vpack.c.b16 %v432, %v431
        %v446 = vpack.c.b16 %v434, %v433
        %v447 = vpack.c.b16 %v436, %v435
        %v448 = vpack.c.b16 %v438, %v437
        %v449 = vpack.c.b16 %v440, %v439
        %v450 = vpack.c.b16 %v442, %v441
        %459 = vmatprep.subr.bf16.mxu0 0
        %460 = vmatpush1.bf16.msra.mxu0 %v450
        %461 = vmatprep.subr.bf16.mxu0 0
        %462 = vmatpush1.bf16.msra.mxu0 %v449
        %463 = vmatprep.subr.bf16.mxu0 0
        %464 = vmatpush1.bf16.msra.mxu0 %v448
        %465 = vmatprep.subr.bf16.mxu0 0
        %466 = vmatpush1.bf16.msra.mxu0 %v447
        %467 = vmatprep.subr.bf16.mxu0 0
        %468 = vmatpush1.bf16.msra.mxu0 %v446
        %469 = vmatprep.subr.bf16.mxu0 0
        %470 = vmatpush1.bf16.msra.mxu0 %v445
        %471 = vmatprep.subr.bf16.mxu0 0
        %472 = vmatpush1.bf16.msra.mxu0 %v444
        %473 = vmatprep.subr.bf16.mxu0 0
        %474 = vmatpush1.bf16.msra.mxu0 %v443
        %475 = vmatprep.subr.bf16.mxu0 0
        %476 = vmatpush2.bf16.msra.mxu0 0
        %477 = vmatprep.subr.bf16.mxu0 0
        %478 = vmatpush2.bf16.msra.mxu0 0
        %479 = vmatprep.subr.bf16.mxu0 0
        %480 = vmatpush2.bf16.msra.mxu0 0
        %481 = vmatprep.subr.bf16.mxu0 0
        %482 = vmatpush2.bf16.msra.mxu0 0
        %483 = vmatprep.subr.bf16.mxu0 0
        %484 = vmatpush2.bf16.msra.mxu0 0
        %485 = vmatprep.subr.bf16.mxu0 0
        %486 = vmatpush2.bf16.msra.mxu0 0
        %487 = vmatprep.subr.bf16.mxu0 0
        %488 = vmatpush2.bf16.msra.mxu0 0
        %489 = vmatprep.subr.bf16.mxu0 0
        %490 = vmatpush2.bf16.msra.mxu0 0
        %491 = vmatprep.mubr.bf16.mxu0 0
        %492 = vmatmul.mubr.bf16.gmra.mxu0 %v387
        %v493 = vpop.f32.mrf.mxu0
        %v494 = vadd.f32 0.0, %v493
        %v495 = vpop.f32.mrf.mxu0
        %v496 = vpop.f32.mrf.mxu0
        %v497 = vadd.f32 0.0, %v496
        %v498 = vpop.f32.mrf.mxu0
        %499 = vmatprep.mubr.bf16.mxu0 0
        %500 = vmatmul.mubr.bf16.gmra.mxu0 %v388
        %v501 = vpop.f32.mrf.mxu0
        %v502 = vadd.f32 0.0, %v501
        %v503 = vpop.f32.mrf.mxu0
        %v504 = vpop.f32.mrf.mxu0
        %v505 = vadd.f32 0.0, %v504
        %v506 = vpop.f32.mrf.mxu0
        %507 = vmatprep.mubr.bf16.mxu0 0
        %508 = vmatmul.mubr.bf16.gmra.mxu0 %v389
        %v509 = vpop.f32.mrf.mxu0
        %v510 = vadd.f32 0.0, %v509
        %v511 = vpop.f32.mrf.mxu0
        %v512 = vpop.f32.mrf.mxu0
        %v513 = vadd.f32 0.0, %v512
        %v514 = vpop.f32.mrf.mxu0
        %515 = vmatprep.mubr.bf16.mxu0 0
        %516 = vmatmul.mubr.bf16.gmra.mxu0 %v390
        %v517 = vpop.f32.mrf.mxu0
        %v518 = vadd.f32 0.0, %v517
        %v519 = vpop.f32.mrf.mxu0
        %v520 = vpop.f32.mrf.mxu0
        %v521 = vadd.f32 0.0, %v520
        %v522 = vpop.f32.mrf.mxu0
        %523 = vmatprep.mubr.bf16.mxu0 0
        %524 = vmatmul.mubr.bf16.gmra.mxu0 %v391
        %v525 = vpop.f32.mrf.mxu0
        %v526 = vadd.f32 0.0, %v525
        %v527 = vpop.f32.mrf.mxu0
        %v528 = vpop.f32.mrf.mxu0
        %v529 = vadd.f32 0.0, %v528
        %v530 = vpop.f32.mrf.mxu0
        %531 = vmatprep.mubr.bf16.mxu0 0
        %532 = vmatmul.mubr.bf16.gmra.mxu0 %v392
        %v533 = vpop.f32.mrf.mxu0
        %v534 = vadd.f32 0.0, %v533
        %v535 = vpop.f32.mrf.mxu0
        %v536 = vpop.f32.mrf.mxu0
        %v537 = vadd.f32 0.0, %v536
        %v538 = vpop.f32.mrf.mxu0
        %539 = vmatprep.mubr.bf16.mxu0 0
        %540 = vmatmul.mubr.bf16.gmra.mxu0 %v393
        %v541 = vpop.f32.mrf.mxu0
        %v542 = vadd.f32 0.0, %v541
        %v543 = vpop.f32.mrf.mxu0
        %v544 = vpop.f32.mrf.mxu0
        %v545 = vadd.f32 0.0, %v544
        %v546 = vpop.f32.mrf.mxu0
        %547 = vmatprep.mubr.bf16.mxu0 0
        %548 = vmatmul.mubr.bf16.gmra.mxu0 %v394
        %v549 = vpop.f32.mrf.mxu0
        %v550 = vadd.f32 0.0, %v549
        %v551 = vpop.f32.mrf.mxu0
        %v552 = vpop.f32.mrf.mxu0
        %v553 = vadd.f32 0.0, %v552
        %v554 = vpop.f32.mrf.mxu0
        %555 = vdwg.mxu0
        %v556 = vadd.f32 %v395, %v494
        %v557 = vadd.f32 %v396, %v497
        %v558 = vadd.f32 %v397, %v502
        %v559 = vadd.f32 %v398, %v505
        %v560 = vadd.f32 %v399, %v510
        %v561 = vadd.f32 %v400, %v513
        %v562 = vadd.f32 %v401, %v518
        %v563 = vadd.f32 %v402, %v521
        %v564 = vadd.f32 %v403, %v526
        %v565 = vadd.f32 %v404, %v529
        %v566 = vadd.f32 %v405, %v534
        %v567 = vadd.f32 %v406, %v537
        %v568 = vadd.f32 %v407, %v542
        %v569 = vadd.f32 %v408, %v545
        %v570 = vadd.f32 %v409, %v550
        %v571 = vadd.f32 %v410, %v553
        %572 = vst [vmem:[#allocation2] sm:$0xff] %v556
        %573 = vst [vmem:[#allocation2 + $0x8] sm:$0xff] %v557
        %574 = vst [vmem:[#allocation2 + $0x10] sm:$0xff] %v558
        %575 = vst [vmem:[#allocation2 + $0x18] sm:$0xff] %v559
        %576 = vst [vmem:[#allocation2 + $0x20] sm:$0xff] %v560
        %577 = vst [vmem:[#allocation2 + $0x28] sm:$0xff] %v561
        %578 = vst [vmem:[#allocation2 + $0x30] sm:$0xff] %v562
        %579 = vst [vmem:[#allocation2 + $0x38] sm:$0xff] %v563
        %580 = vst [vmem:[#allocation2 + $0x40] sm:$0xff] %v564
        %581 = vst [vmem:[#allocation2 + $0x48] sm:$0xff] %v565
        %582 = vst [vmem:[#allocation2 + $0x50] sm:$0xff] %v566
        %583 = vst [vmem:[#allocation2 + $0x58] sm:$0xff] %v567
        %584 = vst [vmem:[#allocation2 + $0x60] sm:$0xff] %v568
        %585 = vst [vmem:[#allocation2 + $0x68] sm:$0xff] %v569
        %586 = vst [vmem:[#allocation2 + $0x70] sm:$0xff] %v570
        %587 = vst [vmem:[#allocation2 + $0x78] sm:$0xff] %v571
        %p588 = scmp.eq.s32.totalorder %s26, 2
        // Predicated region
        $region91: #{tpu_custom_call.1} parent=73 // pred_check
          %p589 = pneg %p588
        $region92: #{tpu_custom_call.1} parent=73 // pred_check_branch
          %591 = sbr.rel (%p589) target = $region94
        $region93: #{tpu_custom_call.1} parent=73 // pred_region
          %v592 = vld [vmem:[%s338] sm:$0xff]
          %v593 = vld [vmem:[%s338 + $0x8] sm:$0xff]
          %v594 = vld [vmem:[%s338 + $0x10] sm:$0xff]
          %v595 = vld [vmem:[%s338 + $0x18] sm:$0xff]
          %v596 = vld [vmem:[%s338 + $0x20] sm:$0xff]
          %v597 = vld [vmem:[%s338 + $0x28] sm:$0xff]
          %v598 = vld [vmem:[%s338 + $0x30] sm:$0xff]
          %v599 = vld [vmem:[%s338 + $0x38] sm:$0xff]
          %v600 = vld [vmem:[%s338 + $0x40] sm:$0xff]
          %v601 = vld [vmem:[%s338 + $0x48] sm:$0xff]
          %v602 = vld [vmem:[%s338 + $0x50] sm:$0xff]
          %v603 = vld [vmem:[%s338 + $0x58] sm:$0xff]
          %v604 = vld [vmem:[%s338 + $0x60] sm:$0xff]
          %v605 = vld [vmem:[%s338 + $0x68] sm:$0xff]
          %v606 = vld [vmem:[%s338 + $0x70] sm:$0xff]
          %v607 = vld [vmem:[%s338 + $0x78] sm:$0xff]
          %v608 = vld [vmem:[#allocation2] sm:$0xff]
          %v609 = vld [vmem:[#allocation2 + $0x8] sm:$0xff]
          %v610 = vld [vmem:[#allocation2 + $0x10] sm:$0xff]
          %v611 = vld [vmem:[#allocation2 + $0x18] sm:$0xff]
          %v612 = vld [vmem:[#allocation2 + $0x20] sm:$0xff]
          %v613 = vld [vmem:[#allocation2 + $0x28] sm:$0xff]
          %v614 = vld [vmem:[#allocation2 + $0x30] sm:$0xff]
          %v615 = vld [vmem:[#allocation2 + $0x38] sm:$0xff]
          %v616 = vld [vmem:[#allocation2 + $0x40] sm:$0xff]
          %v617 = vld [vmem:[#allocation2 + $0x48] sm:$0xff]
          %v618 = vld [vmem:[#allocation2 + $0x50] sm:$0xff]
          %v619 = vld [vmem:[#allocation2 + $0x58] sm:$0xff]
          %v620 = vld [vmem:[#allocation2 + $0x60] sm:$0xff]
          %v621 = vld [vmem:[#allocation2 + $0x68] sm:$0xff]
          %v622 = vld [vmem:[#allocation2 + $0x70] sm:$0xff]
          %v623 = vld [vmem:[#allocation2 + $0x78] sm:$0xff]
          %625 = vset.pattern.permute.xlu0 0
          %626 = vperm.xlu0 %625, %v592
          %v627 = vpop.permute.xlu0 %626
          %630 = vset.pattern.permute.xlu0 0
          %631 = vperm.xlu0 %630, %v593
          %v632 = vpop.permute.xlu0 %631
          %635 = vset.pattern.permute.xlu0 0
          %636 = vperm.xlu0 %635, %v594
          %v637 = vpop.permute.xlu0 %636
          %640 = vset.pattern.permute.xlu0 0
          %641 = vperm.xlu0 %640, %v595
          %v642 = vpop.permute.xlu0 %641
          %645 = vset.pattern.permute.xlu0 0
          %646 = vperm.xlu0 %645, %v596
          %v647 = vpop.permute.xlu0 %646
          %650 = vset.pattern.permute.xlu0 0
          %651 = vperm.xlu0 %650, %v597
          %v652 = vpop.permute.xlu0 %651
          %655 = vset.pattern.permute.xlu0 0
          %656 = vperm.xlu0 %655, %v598
          %v657 = vpop.permute.xlu0 %656
          %660 = vset.pattern.permute.xlu0 0
          %661 = vperm.xlu0 %660, %v599
          %v662 = vpop.permute.xlu0 %661
          %665 = vset.pattern.permute.xlu0 0
          %666 = vperm.xlu0 %665, %v600
          %v667 = vpop.permute.xlu0 %666
          %670 = vset.pattern.permute.xlu0 0
          %671 = vperm.xlu0 %670, %v601
          %v672 = vpop.permute.xlu0 %671
          %675 = vset.pattern.permute.xlu0 0
          %676 = vperm.xlu0 %675, %v602
          %v677 = vpop.permute.xlu0 %676
          %680 = vset.pattern.permute.xlu0 0
          %681 = vperm.xlu0 %680, %v603
          %v682 = vpop.permute.xlu0 %681
          %685 = vset.pattern.permute.xlu0 0
          %686 = vperm.xlu0 %685, %v604
          %v687 = vpop.permute.xlu0 %686
          %690 = vset.pattern.permute.xlu0 0
          %691 = vperm.xlu0 %690, %v605
          %v692 = vpop.permute.xlu0 %691
          %695 = vset.pattern.permute.xlu0 0
          %696 = vperm.xlu0 %695, %v606
          %v697 = vpop.permute.xlu0 %696
          %700 = vset.pattern.permute.xlu0 0
          %701 = vperm.xlu0 %700, %v607
          %v702 = vpop.permute.xlu0 %701
          %v704 = vmul.f32 %v627, %v608
          %v705 = vmul.f32 %v632, %v609
          %v706 = vmul.f32 %v637, %v610
          %v707 = vmul.f32 %v642, %v611
          %v708 = vmul.f32 %v647, %v612
          %v709 = vmul.f32 %v652, %v613
          %v710 = vmul.f32 %v657, %v614
          %v711 = vmul.f32 %v662, %v615
          %v712 = vmul.f32 %v667, %v616
          %v713 = vmul.f32 %v672, %v617
          %v714 = vmul.f32 %v677, %v618
          %v715 = vmul.f32 %v682, %v619
          %v716 = vmul.f32 %v687, %v620
          %v717 = vmul.f32 %v692, %v621
          %v718 = vmul.f32 %v697, %v622
          %v719 = vmul.f32 %v702, %v623
          %v720 = vld [vmem:[%s3] sm:$0x1]
          %v722 = vlaneseq
          %v723 = vshrl.u32 %v722, 7
          %v724 = vsub.s32 0, %v723
          %v725 = vrot.slane %v720, %v724
          %v727 = vadd.f32 %v704, %v725
          %v728 = vadd.f32 %v705, %v725
          %v729 = vadd.f32 %v706, %v725
          %v730 = vadd.f32 %v707, %v725
          %v731 = vadd.f32 %v708, %v725
          %v732 = vadd.f32 %v709, %v725
          %v733 = vadd.f32 %v710, %v725
          %v734 = vadd.f32 %v711, %v725
          %v735 = vadd.f32 %v712, %v725
          %v736 = vadd.f32 %v713, %v725
          %v737 = vadd.f32 %v714, %v725
          %v738 = vadd.f32 %v715, %v725
          %v739 = vadd.f32 %v716, %v725
          %v740 = vadd.f32 %v717, %v725
          %v741 = vadd.f32 %v718, %v725
          %v742 = vadd.f32 %v719, %v725
          %v743 = vmax.f32 %v727, 0.0
          %v744 = vmax.f32 %v728, 0.0
          %v745 = vmax.f32 %v729, 0.0
          %v746 = vmax.f32 %v730, 0.0
          %v747 = vmax.f32 %v731, 0.0
          %v748 = vmax.f32 %v732, 0.0
          %v749 = vmax.f32 %v733, 0.0
          %v750 = vmax.f32 %v734, 0.0
          %v751 = vmax.f32 %v735, 0.0
          %v752 = vmax.f32 %v736, 0.0
          %v753 = vmax.f32 %v737, 0.0
          %v754 = vmax.f32 %v738, 0.0
          %v755 = vmax.f32 %v739, 0.0
          %v756 = vmax.f32 %v740, 0.0
          %v757 = vmax.f32 %v741, 0.0
          %v758 = vmax.f32 %v742, 0.0
          %v759 = vld [vmem:[#allocation7] sm:$0xff]
          %v760 = vld [vmem:[#allocation7 + $0x8] sm:$0xff]
          %v761 = vld [vmem:[#allocation7 + $0x10] sm:$0xff]
          %v762 = vld [vmem:[#allocation7 + $0x18] sm:$0xff]
          %v763 = vld [vmem:[#allocation7 + $0x20] sm:$0xff]
          %v764 = vld [vmem:[#allocation7 + $0x28] sm:$0xff]
          %v765 = vld [vmem:[#allocation7 + $0x30] sm:$0xff]
          %v766 = vld [vmem:[#allocation7 + $0x38] sm:$0xff]
          %v767 = vld [vmem:[#allocation7 + $0x40] sm:$0xff]
          %v768 = vld [vmem:[#allocation7 + $0x48] sm:$0xff]
          %v769 = vld [vmem:[#allocation7 + $0x50] sm:$0xff]
          %v770 = vld [vmem:[#allocation7 + $0x58] sm:$0xff]
          %v771 = vld [vmem:[#allocation7 + $0x60] sm:$0xff]
          %v772 = vld [vmem:[#allocation7 + $0x68] sm:$0xff]
          %v773 = vld [vmem:[#allocation7 + $0x70] sm:$0xff]
          %v774 = vld [vmem:[#allocation7 + $0x78] sm:$0xff]
          %775 = vmatprep.subr.mxu0 0.0
          %776 = vmatpush1.msra.mxu0 %v774
          %777 = vmatprep.subr.mxu0 0.0
          %778 = vmatpush1.msra.mxu0 %v773
          %779 = vmatprep.subr.mxu0 0.0
          %780 = vmatpush1.msra.mxu0 %v772
          %781 = vmatprep.subr.mxu0 0.0
          %782 = vmatpush1.msra.mxu0 %v771
          %783 = vmatprep.subr.mxu0 0.0
          %784 = vmatpush1.msra.mxu0 %v770
          %785 = vmatprep.subr.mxu0 0.0
          %786 = vmatpush1.msra.mxu0 %v769
          %787 = vmatprep.subr.mxu0 0.0
          %788 = vmatpush1.msra.mxu0 %v768
          %789 = vmatprep.subr.mxu0 0.0
          %790 = vmatpush1.msra.mxu0 %v767
          %791 = vmatprep.subr.mxu0 0.0
          %792 = vmatpush1.msra.mxu0 %v766
          %793 = vmatprep.subr.mxu0 0.0
          %794 = vmatpush1.msra.mxu0 %v765
          %795 = vmatprep.subr.mxu0 0.0
          %796 = vmatpush1.msra.mxu0 %v764
          %797 = vmatprep.subr.mxu0 0.0
          %798 = vmatpush1.msra.mxu0 %v763
          %799 = vmatprep.subr.mxu0 0.0
          %800 = vmatpush1.msra.mxu0 %v762
          %801 = vmatprep.subr.mxu0 0.0
          %802 = vmatpush1.msra.mxu0 %v761
          %803 = vmatprep.subr.mxu0 0.0
          %804 = vmatpush1.msra.mxu0 %v760
          %805 = vmatprep.subr.mxu0 0.0
          %806 = vmatpush1.msra.mxu0 %v759
          %807 = vmatprep.subr.mxu0 0.0
          %808 = vmatpush2.msra.mxu0 0.0
          %809 = vmatprep.subr.mxu0 0.0
          %810 = vmatpush2.msra.mxu0 0.0
          %811 = vmatprep.subr.mxu0 0.0
          %812 = vmatpush2.msra.mxu0 0.0
          %813 = vmatprep.subr.mxu0 0.0
          %814 = vmatpush2.msra.mxu0 0.0
          %815 = vmatprep.subr.mxu0 0.0
          %816 = vmatpush2.msra.mxu0 0.0
          %817 = vmatprep.subr.mxu0 0.0
          %818 = vmatpush2.msra.mxu0 0.0
          %819 = vmatprep.subr.mxu0 0.0
          %820 = vmatpush2.msra.mxu0 0.0
          %821 = vmatprep.subr.mxu0 0.0
          %822 = vmatpush2.msra.mxu0 0.0
          %823 = vmatprep.subr.mxu0 0.0
          %824 = vmatpush2.msra.mxu0 0.0
          %825 = vmatprep.subr.mxu0 0.0
          %826 = vmatpush2.msra.mxu0 0.0
          %827 = vmatprep.subr.mxu0 0.0
          %828 = vmatpush2.msra.mxu0 0.0
          %829 = vmatprep.subr.mxu0 0.0
          %830 = vmatpush2.msra.mxu0 0.0
          %831 = vmatprep.subr.mxu0 0.0
          %832 = vmatpush2.msra.mxu0 0.0
          %833 = vmatprep.subr.mxu0 0.0
          %834 = vmatpush2.msra.mxu0 0.0
          %835 = vmatprep.subr.mxu0 0.0
          %836 = vmatpush2.msra.mxu0 0.0
          %837 = vmatprep.subr.mxu0 0.0
          %838 = vmatpush2.msra.mxu0 0.0
          %839 = vmatprep.mubr.f32.mxu0 0.0
          %840 = vmatmul.mubr.f32.gmra.mxu0 %v743
          %v841 = vpop.f32.mrf.mxu0
          %v842 = vadd.f32 0.0, %v841
          %v843 = vpop.f32.mrf.mxu0
          %844 = vmatprep.mubr.f32.mxu0 0.0
          %845 = vmatmul.mubr.f32.gmra.mxu0 %v744
          %v846 = vpop.f32.mrf.mxu0
          %v847 = vadd.f32 0.0, %v846
          %v848 = vpop.f32.mrf.mxu0
          %849 = vmatprep.mubr.f32.mxu0 0.0
          %850 = vmatmul.mubr.f32.gmra.mxu0 %v745
          %v851 = vpop.f32.mrf.mxu0
          %v852 = vadd.f32 0.0, %v851
          %v853 = vpop.f32.mrf.mxu0
          %854 = vmatprep.mubr.f32.mxu0 0.0
          %855 = vmatmul.mubr.f32.gmra.mxu0 %v746
          %v856 = vpop.f32.mrf.mxu0
          %v857 = vadd.f32 0.0, %v856
          %v858 = vpop.f32.mrf.mxu0
          %859 = vmatprep.mubr.f32.mxu0 0.0
          %860 = vmatmul.mubr.f32.gmra.mxu0 %v747
          %v861 = vpop.f32.mrf.mxu0
          %v862 = vadd.f32 0.0, %v861
          %v863 = vpop.f32.mrf.mxu0
          %864 = vmatprep.mubr.f32.mxu0 0.0
          %865 = vmatmul.mubr.f32.gmra.mxu0 %v748
          %v866 = vpop.f32.mrf.mxu0
          %v867 = vadd.f32 0.0, %v866
          %v868 = vpop.f32.mrf.mxu0
          %869 = vmatprep.mubr.f32.mxu0 0.0
          %870 = vmatmul.mubr.f32.gmra.mxu0 %v749
          %v871 = vpop.f32.mrf.mxu0
          %v872 = vadd.f32 0.0, %v871
          %v873 = vpop.f32.mrf.mxu0
          %874 = vmatprep.mubr.f32.mxu0 0.0
          %875 = vmatmul.mubr.f32.gmra.mxu0 %v750
          %v876 = vpop.f32.mrf.mxu0
          %v877 = vadd.f32 0.0, %v876
          %v878 = vpop.f32.mrf.mxu0
          %879 = vmatprep.mubr.f32.mxu0 0.0
          %880 = vmatmul.mubr.f32.gmra.mxu0 %v751
          %v881 = vpop.f32.mrf.mxu0
          %v882 = vadd.f32 0.0, %v881
          %v883 = vpop.f32.mrf.mxu0
          %884 = vmatprep.mubr.f32.mxu0 0.0
          %885 = vmatmul.mubr.f32.gmra.mxu0 %v752
          %v886 = vpop.f32.mrf.mxu0
          %v887 = vadd.f32 0.0, %v886
          %v888 = vpop.f32.mrf.mxu0
          %889 = vmatprep.mubr.f32.mxu0 0.0
          %890 = vmatmul.mubr.f32.gmra.mxu0 %v753
          %v891 = vpop.f32.mrf.mxu0
          %v892 = vadd.f32 0.0, %v891
          %v893 = vpop.f32.mrf.mxu0
          %894 = vmatprep.mubr.f32.mxu0 0.0
          %895 = vmatmul.mubr.f32.gmra.mxu0 %v754
          %v896 = vpop.f32.mrf.mxu0
          %v897 = vadd.f32 0.0, %v896
          %v898 = vpop.f32.mrf.mxu0
          %899 = vmatprep.mubr.f32.mxu0 0.0
          %900 = vmatmul.mubr.f32.gmra.mxu0 %v755
          %v901 = vpop.f32.mrf.mxu0
          %v902 = vadd.f32 0.0, %v901
          %v903 = vpop.f32.mrf.mxu0
          %904 = vmatprep.mubr.f32.mxu0 0.0
          %905 = vmatmul.mubr.f32.gmra.mxu0 %v756
          %v906 = vpop.f32.mrf.mxu0
          %v907 = vadd.f32 0.0, %v906
          %v908 = vpop.f32.mrf.mxu0
          %909 = vmatprep.mubr.f32.mxu0 0.0
          %910 = vmatmul.mubr.f32.gmra.mxu0 %v757
          %v911 = vpop.f32.mrf.mxu0
          %v912 = vadd.f32 0.0, %v911
          %v913 = vpop.f32.mrf.mxu0
          %914 = vmatprep.mubr.f32.mxu0 0.0
          %915 = vmatmul.mubr.f32.gmra.mxu0 %v758
          %v916 = vpop.f32.mrf.mxu0
          %v917 = vadd.f32 0.0, %v916
          %v918 = vpop.f32.mrf.mxu0
          %919 = vdwg.mxu0
          %v920 = vmul.f32 %v627, %v842
          %v921 = vmul.f32 %v632, %v847
          %v922 = vmul.f32 %v637, %v852
          %v923 = vmul.f32 %v642, %v857
          %v924 = vmul.f32 %v647, %v862
          %v925 = vmul.f32 %v652, %v867
          %v926 = vmul.f32 %v657, %v872
          %v927 = vmul.f32 %v662, %v877
          %v928 = vmul.f32 %v667, %v882
          %v929 = vmul.f32 %v672, %v887
          %v930 = vmul.f32 %v677, %v892
          %v931 = vmul.f32 %v682, %v897
          %v932 = vmul.f32 %v687, %v902
          %v933 = vmul.f32 %v692, %v907
          %v934 = vmul.f32 %v697, %v912
          %v935 = vmul.f32 %v702, %v917
          %v936 = vpack.c.bf16 %v921, %v920
          %v937 = vpack.c.bf16 %v923, %v922
          %v938 = vpack.c.bf16 %v925, %v924
          %v939 = vpack.c.bf16 %v927, %v926
          %v940 = vpack.c.bf16 %v929, %v928
          %v941 = vpack.c.bf16 %v931, %v930
          %v942 = vpack.c.bf16 %v933, %v932
          %v943 = vpack.c.bf16 %v935, %v934
          %v952 = vunpack.c.l.b16 %v936
          %v953 = vunpack.c.h.b16 %v936
          %v954 = vunpack.c.l.b16 %v937
          %v955 = vunpack.c.h.b16 %v937
          %v956 = vunpack.c.l.b16 %v938
          %v957 = vunpack.c.h.b16 %v938
          %v958 = vunpack.c.l.b16 %v939
          %v959 = vunpack.c.h.b16 %v939
          %v960 = vunpack.c.l.b16 %v940
          %v961 = vunpack.c.h.b16 %v940
          %v962 = vunpack.c.l.b16 %v941
          %v963 = vunpack.c.h.b16 %v941
          %v964 = vunpack.c.l.b16 %v942
          %v965 = vunpack.c.h.b16 %v942
          %v966 = vunpack.c.l.b16 %v943
          %v967 = vunpack.c.h.b16 %v943
          %v968 = vpack.c.b16 %v952, %v952
          %v969 = vpack.c.b16 %v953, %v953
          %v970 = vpack.c.b16 %v954, %v954
          %v971 = vpack.c.b16 %v955, %v955
          %v972 = vpack.c.b16 %v956, %v956
          %v973 = vpack.c.b16 %v957, %v957
          %v974 = vpack.c.b16 %v958, %v958
          %v975 = vpack.c.b16 %v959, %v959
          %v976 = vpack.c.b16 %v960, %v960
          %v977 = vpack.c.b16 %v961, %v961
          %v978 = vpack.c.b16 %v962, %v962
          %v979 = vpack.c.b16 %v963, %v963
          %v980 = vpack.c.b16 %v964, %v964
          %v981 = vpack.c.b16 %v965, %v965
          %v982 = vpack.c.b16 %v966, %v966
          %v983 = vpack.c.b16 %v967, %v967
          %1000 = vst [vmem:[%s332] sm:$0xf] %v968
          %1001 = vst [vmem:[%s332 + $0x4] sm:$0xf] %v969
          %1002 = vst [vmem:[%s332 + $0x8] sm:$0xf] %v970
          %1003 = vst [vmem:[%s332 + $0xc] sm:$0xf] %v971
          %1004 = vst [vmem:[%s332 + $0x10] sm:$0xf] %v972
          %1005 = vst [vmem:[%s332 + $0x14] sm:$0xf] %v973
          %1006 = vst [vmem:[%s332 + $0x18] sm:$0xf] %v974
          %1007 = vst [vmem:[%s332 + $0x1c] sm:$0xf] %v975
          %1008 = vst [vmem:[%s332 + $0x20] sm:$0xf] %v976
          %1009 = vst [vmem:[%s332 + $0x24] sm:$0xf] %v977
          %1010 = vst [vmem:[%s332 + $0x28] sm:$0xf] %v978
          %1011 = vst [vmem:[%s332 + $0x2c] sm:$0xf] %v979
          %1012 = vst [vmem:[%s332 + $0x30] sm:$0xf] %v980
          %1013 = vst [vmem:[%s332 + $0x34] sm:$0xf] %v981
          %1014 = vst [vmem:[%s332 + $0x38] sm:$0xf] %v982
          %1015 = vst [vmem:[%s332 + $0x3c] sm:$0xf] %v983
        $region94: #{tpu_custom_call.1} parent=73 // pred_fallthru
          _
        %s1016 = sand.u32 %s158, 1
        %s1017 = scalar_lea.sflag [#allocation6], %s1016
        %s1018 = sand.u32 %s158, 1
        %s1019 = smul.addr %s1018, 64
        %s1020 = scalar_lea.vmem [#allocation9], %s1019
        // Predicated region
        $region95: #{tpu_custom_call.1} parent=73 // pred_check
          %p1021 = pneg %p168
        $region96: #{tpu_custom_call.1} parent=73 // pred_check_branch
          %1023 = sbr.rel (%p1021) target = $region98
        $region97: #{tpu_custom_call.1} parent=73 // pred_region
          %s1024 = smul.u32 16, %s25
          %s1026 = ssub.s32 1024, 1024
          %1027 = vsyncadd %s1017, %s1026
          %s1028 = smul.addr %s1024, 64
          %s1029 = scalar_lea.hbm %s5, %s1028
          %s1030 = sshll.u32 %s1020, 4
          %s1031 = int_to_ptr.vmem [resolvable:$true] %s1030
          %1036 = dma.vmem_to_hbm [thread:$0]  %s1031, 1024, %s1029, %s1017, 64, 64, 4
        $region98: #{tpu_custom_call.1} parent=73 // pred_fallthru
          _
      $region74: #{tpu_custom_call.1} parent=5 // pred_fallthru
        _
      %p1037 = scmp.le.s32.totalorder 2, %s16
      // Predicated region
      $region99: #{tpu_custom_call.1} parent=5 // pred_check
        %p1038 = pneg %p1037
      $region100: #{tpu_custom_call.1} parent=5 // pred_check_branch
        %1040 = sbr.rel (%p1038) target = $region102
      $region101: #{tpu_custom_call.1} parent=5 // pred_region
        %s1041 = ssub.s32 %s16, 2
        // Predicated region
        $region103: #{tpu_custom_call.1} parent=101 // pred_check
          %p1042 = pneg %p174
        $region104: #{tpu_custom_call.1} parent=101 // pred_check_branch
          %1044 = sbr.rel (%p1042) target = $region106
        $region105: #{tpu_custom_call.1} parent=101 // pred_region
          %s1045 = sand.u32 %s159, 1
          %s1046 = scalar_lea.sflag [#allocation6], %s1045
          %s1047 = sand.u32 %s159, 1
          %s1048 = smul.addr %s1047, 64
          %s1049 = scalar_lea.vmem [#allocation9], %s1048
          %1050 = dma.done %s1046, 1024
        $region106: #{tpu_custom_call.1} parent=101 // pred_fallthru
          _
      $region102: #{tpu_custom_call.1} parent=5 // pred_fallthru
        _
    $region6: #{tpu_custom_call.1} parent=1 // loop_footer
      %s20 = sadd.s32 1, %s16
    $region7: #{tpu_custom_call.1} parent=1 // loop_footer_branch
      %15 = sbr.rel target = $region3
    $region8: #{tpu_custom_call.1} parent=1 // loop_exit
      _
    %1051 = vsyncpa [#allocation5], 1
    %s1052 = scalar_lea.sflag [#allocation5], 1
    %1053 = vsyncpa %s1052, 1
    %1054 = vsyncpa [#allocation8], 1
    %1055 = vsyncpa [#allocation6], 1
    %s1056 = scalar_lea.sflag [#allocation6], 1
    %1057 = vsyncpa %s1056, 1

</llo_original>
